<compile_context>
chip_gen: v6e
topology: v6e:2x2x1
jax: 0.10.0
libtpu: 0.0.40
codegen_flags: <defaults>
</compile_context>

<pallas_src>
import functools

import jax
import jax.numpy as jnp
from jax import lax
from jax.experimental import pallas as pl
from jax.experimental.pallas import tpu as pltpu

IGNORE_INDEX = -100


def _focal_pow(q, gamma):
    """q ** gamma with gamma a static Python float.

    Integer gamma -> plain multiply chain (VPU only, no EUP log/exp, no
    pow(neg, float) NaN hazard).  Non-integer gamma falls back to real pow
    (valid for gamma > 0; q is clamped to >= 0 by the caller).
    """
    g = float(gamma)
    if g.is_integer() and 0 <= g <= 16:
        gi = int(g)
        if gi == 0:
            return jnp.ones_like(q)
        acc = q
        for _ in range(gi - 1):
            acc = acc * q
        return acc
    return q ** g


def _focal_loss_kernel(x_ref, t_ref, w_ref, num_ref, den_ref, numv, denv,
                       *, gamma, hw, thw, tps, ragged):
    k = pl.program_id(2)

    @pl.when(k == 0)
    def _():
        numv[...] = jnp.zeros_like(numv)
        denv[...] = jnp.zeros_like(denv)

    x = x_ref[0].astype(jnp.float32)      # (C, THW) logits, class axis = sublanes
    t = t_ref[0]                          # (1, THW) int32 targets
    w = w_ref[...]                        # (C, 1)  f32 class weights

    # --- Full (C, THW) work: softmax statistics + one-hot gather only. ---
    m = jnp.max(x, axis=0, keepdims=True)               # (1, THW)
    e = jnp.exp(x - m)                                   # (C, THW) single EUP pass
    s = jnp.sum(e, axis=0, keepdims=True)                # (1, THW)

    cls = lax.broadcasted_iota(jnp.int32, x.shape, 0)
    onehot = cls == t                                    # (C, THW)
    x_t = jnp.sum(jnp.where(onehot, x, 0.0), axis=0, keepdims=True)  # logit[target]
    w_t = jnp.sum(jnp.where(onehot, w, 0.0), axis=0, keepdims=True)  # weight[target]

    # --- Everything else at (1, THW). ---
    z = x_t - m                                          # (1, THW)
    logp_t = z - jnp.log(s)                              # stable log-softmax at target
    p_t = jnp.exp(z) / s                                 # softmax prob at target
    q = jnp.maximum(1.0 - p_t, 0.0)                      # clamp rounding-induced p > 1
    focal_t = _focal_pow(q, gamma) * logp_t              # (1, THW)

    keep = t != IGNORE_INDEX
    if ragged:
        # Ragged / overshooting tile: mask out-of-range columns (true select,
        # so inf/NaN from padded garbage never propagates).
        s_id = pl.program_id(1)
        col = (s_id * tps + k) * thw + lax.broadcasted_iota(jnp.int32, (1, thw), 1)
        keep = keep & (col < hw)

    numv[...] += jnp.where(keep, w_t * focal_t, 0.0)
    denv[...] += jnp.where(keep, w_t, 0.0)

    @pl.when(k == pl.num_programs(2) - 1)
    def _():
        num_ref[...] = (-jnp.sum(numv[...])).reshape(1, 1, 1, 1)
        den_ref[...] = jnp.sum(denv[...]).reshape(1, 1, 1, 1)


def focal_loss(output, target, weight=None, gamma=2.0,
               tile_bytes=int(1.5 * 2**20), vmem_budget=12 * 2**20):
    """output: (N, C, H, W) float; target: (N, H, W) int. Returns scalar mean loss."""
    n, c, h, w_sp = output.shape
    hw = h * w_sp

    x = output.reshape(n, c, hw)                    # free reshape, keep HBM dtype
    t = target.reshape(n, 1, hw).astype(jnp.int32)  # free reshape

    if weight is None:
        weight = jnp.ones((c,), jnp.float32)
    w = jnp.asarray(weight, jnp.float32).reshape(c, 1)

    db = jnp.dtype(output.dtype).itemsize

    # HW tile: target ~tile_bytes of logits per grid step (amortize per-step
    # pipeline overhead for small C), capped so double-buffered inputs plus
    # in-kernel f32 temps stay under vmem_budget (fits the smallest scoped
    # VMEM default, v5e's 16 MiB, without touching vmem_limit_bytes).
    per_col = 2 * (c * db + 4) + 4 * c * 4 + 8 * 4
    thw = min(int(tile_bytes) // (c * db), int(vmem_budget) // per_col)
    thw = max(128, (thw // 128) * 128)
    if hw <= thw:
        thw = hw                                    # single exact tile (block == full dim)
    num_tiles = pl.cdiv(hw, thw)

    # Megacore (v7x has 2 TCs/chip): if the batch axis alone can't feed two
    # cores, add a second "parallel" split across the HW tiles.
    n_split = 2 if (n == 1 and num_tiles >= 2) else 1
    tps = pl.cdiv(num_tiles, n_split)               # tiles per split
    overshoot = (n_split * tps) != num_tiles        # last split re-reads a tile
    ragged = overshoot or (hw % thw != 0)

    if overshoot:
        def hw_tile(s, k):
            # Clamp the re-read tile to a valid block; its columns are masked
            # out in-kernel via the `col < hw` check (ragged=True).
            return jnp.minimum(s * tps + k, num_tiles - 1)
    else:
        def hw_tile(s, k):
            return s * tps + k

    kernel = functools.partial(_focal_loss_kernel, gamma=float(gamma),
                               hw=hw, thw=thw, tps=tps, ragged=ragged)

    num, den = pl.pallas_call(
        kernel,
        out_shape=(
            jax.ShapeDtypeStruct((n, n_split, 1, 1), jnp.float32),
            jax.ShapeDtypeStruct((n, n_split, 1, 1), jnp.float32),
        ),
        grid_spec=pltpu.PrefetchScalarGridSpec(
            num_scalar_prefetch=0,
            grid=(n, n_split, tps),
            in_specs=[
                pl.BlockSpec((1, c, thw), lambda i, s, k: (i, 0, hw_tile(s, k))),
                pl.BlockSpec((1, 1, thw), lambda i, s, k: (i, 0, hw_tile(s, k))),
                pl.BlockSpec((c, 1), lambda i, s, k: (0, 0)),
            ],
            out_specs=[
                pl.BlockSpec((1, 1, 1, 1), lambda i, s, k: (i, s, 0, 0)),
                pl.BlockSpec((1, 1, 1, 1), lambda i, s, k: (i, s, 0, 0)),
            ],
            scratch_shapes=[
                pltpu.VMEM((1, thw), jnp.float32),   # num partials (lane vector)
                pltpu.VMEM((1, thw), jnp.float32),   # den partials (lane vector)
            ],
        ),
        compiler_params=pltpu.CompilerParams(
            dimension_semantics=("parallel", "parallel", "arbitrary")),
    )(x, t, w)

    # reduction='mean' with class weights: sum(w_i * loss_i) / sum(w_i)
    return jnp.sum(num) / jnp.sum(den)


def focal_loss_ref(output, target, weight=None, gamma=2.0):
    """Pure-JAX reference mirroring the PyTorch module."""
    n, c, h, w_sp = output.shape
    x = jnp.transpose(output, (0, 2, 3, 1)).reshape(-1, c).astype(jnp.float32)
    t = target.reshape(-1)
    if weight is None:
        weight = jnp.ones((c,), jnp.float32)
    logp = jax.nn.log_softmax(x, axis=-1)
    p = jnp.exp(logp)
    focal = (1.0 - p) ** gamma * logp
    valid = t != IGNORE_INDEX
    t_safe = jnp.where(valid, t, 0)
    sel = jnp.take_along_axis(focal, t_safe[:, None], axis=-1)[:, 0]
    w_row = weight[t_safe] * valid.astype(jnp.float32)
    return jnp.sum(-w_row * sel) / jnp.sum(w_row)


if __name__ == "__main__":
    key = jax.random.PRNGKey(0)
    k1, k2 = jax.random.split(key)

    N, C, H, W = 2, 4, 16, 16
    logits = jax.random.normal(k1, (N, C, H, W), jnp.float32) * 2.0
    target = jax.random.randint(k2, (N, H, W), 0, C, jnp.int32)
    # Sprinkle some ignore_index entries to exercise masking.
    target = target.at[0, 0, :4].set(IGNORE_INDEX)

    # Deterministic, non-trivial per-class weights.
    class_weight = jnp.array([1.0, 0.5, 2.0, 1.5], jnp.float32)
    gamma = 2.0

    loss = focal_loss(logits, target, weight=class_weight, gamma=gamma)
    loss = jax.block_until_ready(loss)

    ref = focal_loss_ref(logits, target, weight=class_weight, gamma=gamma)
    assert jnp.allclose(loss, ref, rtol=1e-5, atol=1e-5), (loss, ref)

    print("KERNEL_OK")
</pallas_src>

<mosaic_0001>
module attributes {stable_mosaic.version = 11 : i64} {
  func.func @_focal_loss_kernel(%arg0: i32, %arg1: i32, %arg2: i32, %arg3: memref<1x4x256xf32, #tpu.memory_space<vmem>>, %arg4: memref<1x1x256xi32, #tpu.memory_space<vmem>>, %arg5: memref<4x1xf32, #tpu.memory_space<vmem>>, %arg6: memref<1x1x1x1xf32, #tpu.memory_space<vmem>>, %arg7: memref<1x1x1x1xf32, #tpu.memory_space<vmem>>, %arg8: memref<1x256xf32, #tpu.memory_space<vmem>>, %arg9: memref<1x256xf32, #tpu.memory_space<vmem>>) attributes {dimension_semantics = [#tpu.dimension_semantics<parallel>, #tpu.dimension_semantics<parallel>, #tpu.dimension_semantics<arbitrary>], iteration_bounds = array<i64: 2, 1, 1>, scalar_prefetch = 0 : i64, scratch_operands = 2 : i64, tpu.core_type = #tpu.core_type<tc>, window_params = [{transform_indices = @transform_0, window_bounds = array<i64: 1, 4, 256>}, {transform_indices = @transform_1, window_bounds = array<i64: 1, 1, 256>}, {pipeline_mode = #tpu.pipeline_mode<synchronous>, transform_indices = @transform_2, window_bounds = array<i64: 4, 1>}, {transform_indices = @transform_3, window_bounds = array<i64: 1, 1, 1, 1>}, {transform_indices = @transform_4, window_bounds = array<i64: 1, 1, 1, 1>}]} {
    %c0_i32 = arith.constant 0 : i32
    %0 = arith.cmpi eq, %arg2, %c0_i32 : i32
    %1 = arith.extui %0 : i1 to i32
    %c0_i32_0 = arith.constant 0 : i32
    %2 = arith.cmpi ne, %1, %c0_i32_0 : i32
    scf.if %2 {
      %cst_27 = arith.constant 0.000000e+00 : f32
      %55 = vector.broadcast %cst_27 : f32 to vector<1x256xf32>
      %c0_28 = arith.constant 0 : index
      %c0_29 = arith.constant 0 : index
      %56 = vector.load %arg8[%c0_28, %c0_29] : memref<1x256xf32, #tpu.memory_space<vmem>>, vector<1x256xf32>
      tpu.vector_store %arg8[%c0_28, %c0_29], %55 {strides = array<i32>} : memref<1x256xf32, #tpu.memory_space<vmem>>, vector<1x256xf32>,
      %cst_30 = arith.constant 0.000000e+00 : f32
      %57 = vector.broadcast %cst_30 : f32 to vector<1x256xf32>
      %c0_31 = arith.constant 0 : index
      %c0_32 = arith.constant 0 : index
      %58 = vector.load %arg9[%c0_31, %c0_32] : memref<1x256xf32, #tpu.memory_space<vmem>>, vector<1x256xf32>
      tpu.vector_store %arg9[%c0_31, %c0_32], %57 {strides = array<i32>} : memref<1x256xf32, #tpu.memory_space<vmem>>, vector<1x256xf32>,
    } else {
    }
    %c0 = arith.constant 0 : index
    %c0_1 = arith.constant 0 : index
    %c0_2 = arith.constant 0 : index
    %3 = vector.load %arg3[%c0, %c0_1, %c0_2] : memref<1x4x256xf32, #tpu.memory_space<vmem>>, vector<1x4x256xf32>
    %4 = vector.shape_cast %3 : vector<1x4x256xf32> to vector<4x256xf32>
    %c0_3 = arith.constant 0 : index
    %c0_4 = arith.constant 0 : index
    %c0_5 = arith.constant 0 : index
    %5 = vector.load %arg4[%c0_3, %c0_4, %c0_5] : memref<1x1x256xi32, #tpu.memory_space<vmem>>, vector<1x1x256xi32>
    %6 = vector.shape_cast %5 : vector<1x1x256xi32> to vector<1x256xi32>
    %c0_6 = arith.constant 0 : index
    %c0_7 = arith.constant 0 : index
    %7 = vector.load %arg5[%c0_6, %c0_7] : memref<4x1xf32, #tpu.memory_space<vmem>>, vector<4x1xf32>
    %cst = arith.constant dense<0xFF800000> : vector<256xf32>
    %8 = vector.multi_reduction <maximumf>, %4, %cst [0] : vector<4x256xf32> to vector<256xf32>
    %9 = vector.shape_cast %8 : vector<256xf32> to vector<1x256xf32>
    %10 = vector.broadcast %9 : vector<1x256xf32> to vector<4x256xf32>
    %11 = arith.subf %4, %10 : vector<4x256xf32>
    %12 = math.exp %11 : vector<4x256xf32>
    %cst_8 = arith.constant dense<0.000000e+00> : vector<256xf32>
    %13 = vector.multi_reduction <add>, %12, %cst_8 [0] : vector<4x256xf32> to vector<256xf32>
    %14 = vector.shape_cast %13 : vector<256xf32> to vector<1x256xf32>
    %15 = tpu.iota {dimensions = array<i32: 0>} : vector<4x256xi32>
    %16 = vector.broadcast %6 : vector<1x256xi32> to vector<4x256xi32>
    %17 = arith.cmpi eq, %15, %16 : vector<4x256xi32>
    %cst_9 = arith.constant 0.000000e+00 : f32
    %18 = vector.broadcast %cst_9 : f32 to vector<4x256xf32>
    %19 = arith.select %17, %4, %18 : vector<4x256xi1>, vector<4x256xf32>
    %cst_10 = arith.constant dense<0.000000e+00> : vector<256xf32>
    %20 = vector.multi_reduction <add>, %19, %cst_10 [0] : vector<4x256xf32> to vector<256xf32>
    %21 = vector.shape_cast %20 : vector<256xf32> to vector<1x256xf32>
    %cst_11 = arith.constant 0.000000e+00 : f32
    %22 = vector.shape_cast %7 : vector<4x1xf32> to vector<4x1xf32>
    %23 = vector.broadcast %22 : vector<4x1xf32> to vector<4x256xf32>
    %24 = vector.broadcast %cst_11 : f32 to vector<4x256xf32>
    %25 = arith.select %17, %23, %24 : vector<4x256xi1>, vector<4x256xf32>
    %cst_12 = arith.constant dense<0.000000e+00> : vector<256xf32>
    %26 = vector.multi_reduction <add>, %25, %cst_12 [0] : vector<4x256xf32> to vector<256xf32>
    %27 = vector.shape_cast %26 : vector<256xf32> to vector<1x256xf32>
    %28 = arith.subf %21, %9 : vector<1x256xf32>
    %29 = math.log %14 : vector<1x256xf32>
    %30 = arith.subf %28, %29 : vector<1x256xf32>
    %31 = math.exp %28 : vector<1x256xf32>
    %32 = arith.divf %31, %14 : vector<1x256xf32>
    %cst_13 = arith.constant 1.000000e+00 : f32
    %33 = vector.broadcast %cst_13 : f32 to vector<1x256xf32>
    %34 = arith.subf %33, %32 : vector<1x256xf32>
    %cst_14 = arith.constant 0.000000e+00 : f32
    %35 = vector.broadcast %cst_14 : f32 to vector<1x256xf32>
    %36 = arith.maximumf %34, %35 : vector<1x256xf32>
    %37 = arith.mulf %36, %36 : vector<1x256xf32>
    %38 = arith.mulf %37, %30 : vector<1x256xf32>
    %c-100_i32 = arith.constant -100 : i32
    %39 = vector.broadcast %c-100_i32 : i32 to vector<1x256xi32>
    %40 = arith.cmpi ne, %6, %39 : vector<1x256xi32>
    %c0_15 = arith.constant 0 : index
    %c0_16 = arith.constant 0 : index
    %41 = vector.load %arg8[%c0_15, %c0_16] : memref<1x256xf32, #tpu.memory_space<vmem>>, vector<1x256xf32>
    %42 = arith.mulf %27, %38 : vector<1x256xf32>
    %cst_17 = arith.constant 0.000000e+00 : f32
    %43 = vector.broadcast %cst_17 : f32 to vector<1x256xf32>
    %44 = arith.select %40, %42, %43 : vector<1x256xi1>, vector<1x256xf32>
    %45 = arith.addf %41, %44 : vector<1x256xf32>
    %c0_18 = arith.constant 0 : index
    %c0_19 = arith.constant 0 : index
    %46 = vector.load %arg8[%c0_18, %c0_19] : memref<1x256xf32, #tpu.memory_space<vmem>>, vector<1x256xf32>
    tpu.vector_store %arg8[%c0_18, %c0_19], %45 {strides = array<i32>} : memref<1x256xf32, #tpu.memory_space<vmem>>, vector<1x256xf32>,
    %c0_20 = arith.constant 0 : index
    %c0_21 = arith.constant 0 : index
    %47 = vector.load %arg9[%c0_20, %c0_21] : memref<1x256xf32, #tpu.memory_space<vmem>>, vector<1x256xf32>
    %cst_22 = arith.constant 0.000000e+00 : f32
    %48 = vector.broadcast %cst_22 : f32 to vector<1x256xf32>
    %49 = arith.select %40, %27, %48 : vector<1x256xi1>, vector<1x256xf32>
    %50 = arith.addf %47, %49 : vector<1x256xf32>
    %c0_23 = arith.constant 0 : index
    %c0_24 = arith.constant 0 : index
    %51 = vector.load %arg9[%c0_23, %c0_24] : memref<1x256xf32, #tpu.memory_space<vmem>>, vector<1x256xf32>
    tpu.vector_store %arg9[%c0_23, %c0_24], %50 {strides = array<i32>} : memref<1x256xf32, #tpu.memory_space<vmem>>, vector<1x256xf32>,
    %c0_i32_25 = arith.constant 0 : i32
    %52 = arith.cmpi eq, %arg2, %c0_i32_25 : i32
    %53 = arith.extui %52 : i1 to i32
    %c0_i32_26 = arith.constant 0 : i32
    %54 = arith.cmpi ne, %53, %c0_i32_26 : i32
    scf.if %54 {
      %c0_27 = arith.constant 0 : index
      %c0_28 = arith.constant 0 : index
      %55 = vector.load %arg8[%c0_27, %c0_28] : memref<1x256xf32, #tpu.memory_space<vmem>>, vector<1x256xf32>
      %56 = vector.shape_cast %55 : vector<1x256xf32> to vector<1x1x256xf32>
      %cst_29 = arith.constant dense<0.000000e+00> : vector<1xf32>
      %57 = vector.multi_reduction <add>, %56, %cst_29 [1, 2] : vector<1x1x256xf32> to vector<1xf32>
      %58 = vector.shape_cast %57 : vector<1xf32> to vector<1x1x1xf32>
      %59 = vector.extract %58[0, 0, 0] : f32 from vector<1x1x1xf32>
      %cst_30 = arith.constant 0.000000e+00 : f32
      %60 = arith.subf %cst_30, %59 : f32
      %61 = vector.broadcast %60 : f32 to vector<1x1x1x1xf32>
      %c0_31 = arith.constant 0 : index
      %c0_32 = arith.constant 0 : index
      %c0_33 = arith.constant 0 : index
      %c0_34 = arith.constant 0 : index
      %62 = vector.load %arg6[%c0_31, %c0_32, %c0_33, %c0_34] : memref<1x1x1x1xf32, #tpu.memory_space<vmem>>, vector<1x1x1x1xf32>
      tpu.vector_store %arg6[%c0_31, %c0_32, %c0_33, %c0_34], %61 {strides = array<i32>} : memref<1x1x1x1xf32, #tpu.memory_space<vmem>>, vector<1x1x1x1xf32>,
      %c0_35 = arith.constant 0 : index
      %c0_36 = arith.constant 0 : index
      %63 = vector.load %arg9[%c0_35, %c0_36] : memref<1x256xf32, #tpu.memory_space<vmem>>, vector<1x256xf32>
      %64 = vector.shape_cast %63 : vector<1x256xf32> to vector<1x1x256xf32>
      %cst_37 = arith.constant dense<0.000000e+00> : vector<1xf32>
      %65 = vector.multi_reduction <add>, %64, %cst_37 [1, 2] : vector<1x1x256xf32> to vector<1xf32>
      %66 = vector.shape_cast %65 : vector<1xf32> to vector<1x1x1xf32>
      %67 = vector.extract %66[0, 0, 0] : f32 from vector<1x1x1xf32>
      %68 = vector.broadcast %67 : f32 to vector<1x1x1x1xf32>
      %c0_38 = arith.constant 0 : index
      %c0_39 = arith.constant 0 : index
      %c0_40 = arith.constant 0 : index
      %c0_41 = arith.constant 0 : index
      %69 = vector.load %arg7[%c0_38, %c0_39, %c0_40, %c0_41] : memref<1x1x1x1xf32, #tpu.memory_space<vmem>>, vector<1x1x1x1xf32>
      tpu.vector_store %arg7[%c0_38, %c0_39, %c0_40, %c0_41], %68 {strides = array<i32>} : memref<1x1x1x1xf32, #tpu.memory_space<vmem>>, vector<1x1x1x1xf32>,
    } else {
    }
    return
  }
  func.func @transform_0(%arg0: i32, %arg1: i32, %arg2: i32) -> (i32, i32, i32) {
    %c1_i32 = arith.constant 1 : i32
    %0 = arith.muli %arg1, %c1_i32 : i32
    %1 = arith.addi %0, %arg2 : i32
    %c0_i32 = arith.constant 0 : i32
    %c0_i32_0 = arith.constant 0 : i32
    return %arg0, %c0_i32, %1 : i32, i32, i32
  }
  func.func @transform_1(%arg0: i32, %arg1: i32, %arg2: i32) -> (i32, i32, i32) {
    %c1_i32 = arith.constant 1 : i32
    %0 = arith.muli %arg1, %c1_i32 : i32
    %1 = arith.addi %0, %arg2 : i32
    %c0_i32 = arith.constant 0 : i32
    %c0_i32_0 = arith.constant 0 : i32
    return %arg0, %c0_i32, %1 : i32, i32, i32
  }
  func.func @transform_2(%arg0: i32, %arg1: i32, %arg2: i32) -> (i32, i32) {
    %c0_i32 = arith.constant 0 : i32
    %c0_i32_0 = arith.constant 0 : i32
    %c0_i32_1 = arith.constant 0 : i32
    return %c0_i32, %c0_i32_0 : i32, i32
  }
  func.func @transform_3(%arg0: i32, %arg1: i32, %arg2: i32) -> (i32, i32, i32, i32) {
    %c0_i32 = arith.constant 0 : i32
    %c0_i32_0 = arith.constant 0 : i32
    %c0_i32_1 = arith.constant 0 : i32
    return %arg0, %arg1, %c0_i32, %c0_i32_0 : i32, i32, i32, i32
  }
  func.func @transform_4(%arg0: i32, %arg1: i32, %arg2: i32) -> (i32, i32, i32, i32) {
    %c0_i32 = arith.constant 0 : i32
    %c0_i32_0 = arith.constant 0 : i32
    %c0_i32_1 = arith.constant 0 : i32
    return %arg0, %arg1, %c0_i32, %c0_i32_0 : i32, i32, i32, i32
  }
}

</mosaic_0001>

<llo_original>
// kernel: tpu_custom_call.1
$region0: #{tpu_custom_call.1}
  #allocation0 [shape = 'u32[]', space=smem, size = 0x4, offset = 0x4, fixed_abs, tag = 'smem constant byte address 0x4 - core index']
  #allocation1 [shape = 'u32[144,128]{1,0:T(1,128)}', space=vmem, size = 0x12000, scoped, tag = 'internal scratch']
  #allocation2 [shape = 'f32[1,256]{1,0:T(1,128)}', space=vmem, size = 0x400, scoped, tag = 'scratch operand']
  #allocation3 [shape = 'f32[1,256]{1,0:T(1,128)}', space=vmem, size = 0x400, scoped, tag = 'scratch operand']
  %s0 = inlined_call_operand.hbm [shape: f32[2,4,256], index: 0, kind: input, shape index: {}]
  %s1 = inlined_call_operand.vmem [shape: s32[2,1,256], index: 1, kind: input, shape index: {}]
  %s2 = inlined_call_operand.vmem [shape: f32[4,1], index: 2, kind: input, shape index: {}]
  %s3 = inlined_call_operand.vmem [shape: f32[2,1,1,1], index: 3, kind: output, shape index: {0}]
  %s4 = inlined_call_operand.vmem [shape: f32[2,1,1,1], index: 4, kind: output, shape index: {1}]
  %5 = xla_tuple %s3, %s4
  %s6 = sld [smem:[#allocation0]]
  $region65: #{tpu_custom_call.1} parent=0
    _
  %s8 = ssub.s32 1, %s6
  %s9 = scalar_select 0, %s8, %s6
  $region1: #{tpu_custom_call.1} parent=0
    #allocation4 [shape = 'u8[8192]{0}', space=vmem, size = 0x2000, scoped, tag = 'input window, operand 0']
    #allocation5 [shape = 's32[2]{0}', space=sflag, size = 0x8, scoped, tag = 'scoped memory for tpu_custom_call.1']
    %10 = vsyncpa [#allocation5], 0
    %s11 = scalar_lea.sflag [#allocation5], 1
    %12 = vsyncpa %s11, 0
    loop: start=0, step=1, limit=4
    $region2: #{tpu_custom_call.1} parent=1 // loop_pre_header
      _
    $region3: #{tpu_custom_call.1} parent=1 // loop_header
      %s14 = sphi 0, %s18
      %p15 = scmp.ge.s32.totalorder %s14, 4
      %s21 = sphi 0, %s40
      %s22 = sphi 0, %s36
      %s23 = sphi 0, %s32
      %s24 = sphi 0, %s21
      %s25 = sphi 0, %s22
      %s26 = sphi 0, %s23
      %s27 = sphi 0, %s24
      %s28 = sphi 0, %s25
      %s29 = sphi 0, %s26
      %s47 = sphi 0, %s49
      %s50 = sphi 0, %s47
      %s51 = sphi 0, %s50
      %s67 = sphi 0, %s51
      %s77 = sphi 0, %s79
      %s80 = sphi 0, %s77
      %s81 = sphi 0, %s80
      %s97 = sphi 0, %s81
      %s101 = sphi 0, %s101
      %s103 = sphi 0, %s101
      %s104 = sphi 0, %s103
      %s118 = sphi 0, %s104
      %s126 = sphi 0, %s128
      %s129 = sphi 0, %s126
      %s130 = sphi 0, %s129
      %s146 = sphi 0, %s130
      %s154 = sphi 0, %s156
      %s157 = sphi 0, %s154
      %s158 = sphi 0, %s157
      %s174 = sphi 0, %s158
    $region4: #{tpu_custom_call.1} parent=1 // loop_header_branch
      %17 = sbr.rel (%p15) target = $region8
    $region5: #{tpu_custom_call.1} parent=1 // loop_body
      %s19 = ssub.s32 %s14, 1
      %s20 = ssub.s32 %s14, 2
      %s30 = sadd.s32 1, %s23
      %p31 = scmp.ge.s32.totalorder %s30, 1
      %s32 = scalar_select %p31, 0, %s30
      %s33 = sadd.s32 1, %s22
      %s34 = scalar_select %p31, %s33, %s22
      %p35 = scmp.ge.s32.totalorder %s34, 1
      %s36 = scalar_select %p35, 0, %s34
      %s37 = sadd.s32 1, %s21
      %s38 = scalar_select %p35, %s37, %s21
      %p39 = scmp.ge.s32.totalorder %s38, 2
      %s40 = scalar_select %p39, 0, %s38
      %s41 = sadd.s32 %s22, %s23
      %s42 = sadd.s32 %s36, %s32
      %s43 = ssub.s32 %s21, %s40
      %s44 = ssub.s32 %s41, %s42
      %s45 = sor.u32 %s43, %s44
      %p46 = scmp.eq.s32.totalorder %s45, 0
      %s48 = sadd.s32 %s47, 1
      %s49 = scalar_select %p46, %s47, %s48
      %p52 = pneg %p46
      %p53 = scmp.eq.s32.totalorder %s14, 1
      %p54 = por %p52, %p53
      %p55 = scmp.ne.s32.totalorder %s47, %s50
      %p56 = scmp.eq.s32.totalorder %s14, 0
      %p57 = por %p55, %p56
      %p58 = scmp.ne.s32.totalorder %s47, %s50
      %p59 = scmp.eq.s32.totalorder %s19, 1
      %p60 = por %p58, %p59
      %p61 = scmp.ne.s32.totalorder %s50, %s51
      %p62 = scmp.eq.s32.totalorder %s19, 0
      %p63 = por %p61, %p62
      %p64 = scmp.ne.s32.totalorder %s50, %s51
      %p65 = scmp.eq.s32.totalorder %s20, 1
      %p66 = por %p64, %p65
      %p68 = scmp.ne.s32.totalorder %s51, %s67
      %p69 = scmp.eq.s32.totalorder %s20, 0
      %p70 = por %p68, %p69
      %s71 = sadd.s32 %s22, %s23
      %s72 = sadd.s32 %s36, %s32
      %s73 = ssub.s32 %s21, %s40
      %s74 = ssub.s32 %s71, %s72
      %s75 = sor.u32 %s73, %s74
      %p76 = scmp.eq.s32.totalorder %s75, 0
      %s78 = sadd.s32 %s77, 1
      %s79 = scalar_select %p76, %s77, %s78
      %p82 = pneg %p76
      %p83 = scmp.eq.s32.totalorder %s14, 1
      %p84 = por %p82, %p83
      %p85 = scmp.ne.s32.totalorder %s77, %s80
      %p86 = scmp.eq.s32.totalorder %s14, 0
      %p87 = por %p85, %p86
      %p88 = scmp.ne.s32.totalorder %s77, %s80
      %p89 = scmp.eq.s32.totalorder %s19, 1
      %p90 = por %p88, %p89
      %p91 = scmp.ne.s32.totalorder %s80, %s81
      %p92 = scmp.eq.s32.totalorder %s19, 0
      %p93 = por %p91, %p92
      %p94 = scmp.ne.s32.totalorder %s80, %s81
      %p95 = scmp.eq.s32.totalorder %s20, 1
      %p96 = por %p94, %p95
      %p98 = scmp.ne.s32.totalorder %s81, %s97
      %p99 = scmp.eq.s32.totalorder %s20, 0
      %p100 = por %p98, %p99
      %s102 = sadd.s32 %s101, 1
      %p105 = scmp.eq.s32.totalorder %s14, 1
      %p106 = scmp.ne.s32.totalorder %s101, %s103
      %p107 = scmp.eq.s32.totalorder %s14, 0
      %p108 = por %p106, %p107
      %p109 = scmp.ne.s32.totalorder %s101, %s103
      %p110 = scmp.eq.s32.totalorder %s19, 1
      %p111 = por %p109, %p110
      %p112 = scmp.ne.s32.totalorder %s103, %s104
      %p113 = scmp.eq.s32.totalorder %s19, 0
      %p114 = por %p112, %p113
      %p115 = scmp.ne.s32.totalorder %s103, %s104
      %p116 = scmp.eq.s32.totalorder %s20, 1
      %p117 = por %p115, %p116
      %p119 = scmp.ne.s32.totalorder %s104, %s118
      %p120 = scmp.eq.s32.totalorder %s20, 0
      %p121 = por %p119, %p120
      %s122 = ssub.s32 %s21, %s40
      %s123 = ssub.s32 %s22, %s36
      %s124 = sor.u32 %s122, %s123
      %p125 = scmp.eq.s32.totalorder %s124, 0
      %s127 = sadd.s32 %s126, 1
      %s128 = scalar_select %p125, %s126, %s127
      %p131 = pneg %p125
      %p132 = scmp.eq.s32.totalorder %s14, 1
      %p133 = por %p131, %p132
      %p134 = scmp.ne.s32.totalorder %s126, %s129
      %p135 = scmp.eq.s32.totalorder %s14, 0
      %p136 = por %p134, %p135
      %p137 = scmp.ne.s32.totalorder %s126, %s129
      %p138 = scmp.eq.s32.totalorder %s19, 1
      %p139 = por %p137, %p138
      %p140 = scmp.ne.s32.totalorder %s129, %s130
      %p141 = scmp.eq.s32.totalorder %s19, 0
      %p142 = por %p140, %p141
      %p143 = scmp.ne.s32.totalorder %s129, %s130
      %p144 = scmp.eq.s32.totalorder %s20, 1
      %p145 = por %p143, %p144
      %p147 = scmp.ne.s32.totalorder %s130, %s146
      %p148 = scmp.eq.s32.totalorder %s20, 0
      %p149 = por %p147, %p148
      %s150 = ssub.s32 %s21, %s40
      %s151 = ssub.s32 %s22, %s36
      %s152 = sor.u32 %s150, %s151
      %p153 = scmp.eq.s32.totalorder %s152, 0
      %s155 = sadd.s32 %s154, 1
      %s156 = scalar_select %p153, %s154, %s155
      %p159 = pneg %p153
      %p160 = scmp.eq.s32.totalorder %s14, 1
      %p161 = por %p159, %p160
      %p162 = scmp.ne.s32.totalorder %s154, %s157
      %p163 = scmp.eq.s32.totalorder %s14, 0
      %p164 = por %p162, %p163
      %p165 = scmp.ne.s32.totalorder %s154, %s157
      %p166 = scmp.eq.s32.totalorder %s19, 1
      %p167 = por %p165, %p166
      %p168 = scmp.ne.s32.totalorder %s157, %s158
      %p169 = scmp.eq.s32.totalorder %s19, 0
      %p170 = por %p168, %p169
      %p171 = scmp.ne.s32.totalorder %s157, %s158
      %p172 = scmp.eq.s32.totalorder %s20, 1
      %p173 = por %p171, %p172
      %p175 = scmp.ne.s32.totalorder %s158, %s174
      %p176 = scmp.eq.s32.totalorder %s20, 0
      %p177 = por %p175, %p176
      %p178 = scmp.le.s32.totalorder 1, %s14
      %p179 = scmp.lt.s32.totalorder %s14, 3
      %p180 = pnand %p178, %p179
      %p181 = pneg %p180
      // Predicated region
      $region9: #{tpu_custom_call.1} parent=5 // pred_check
        _
      $region10: #{tpu_custom_call.1} parent=5 // pred_check_branch
        %183 = sbr.rel (%p180) target = $region12
      $region11: #{tpu_custom_call.1} parent=5 // pred_region
        %s184 = ssub.s32 %s14, 1
        // Predicated region
        $region13: #{tpu_custom_call.1} parent=11 // pred_check
          %p185 = pneg %p114
        $region14: #{tpu_custom_call.1} parent=11 // pred_check_branch
          %187 = sbr.rel (%p185) target = $region16
        $region15: #{tpu_custom_call.1} parent=11 // pred_region
          _
        $region16: #{tpu_custom_call.1} parent=11 // pred_fallthru
          _
      $region12: #{tpu_custom_call.1} parent=5 // pred_fallthru
        _
      %p188 = scmp.lt.s32.totalorder %s14, 2
      // Predicated region
      $region17: #{tpu_custom_call.1} parent=5 // pred_check
        %p189 = pneg %p188
      $region18: #{tpu_custom_call.1} parent=5 // pred_check_branch
        %191 = sbr.rel (%p189) target = $region20
      $region19: #{tpu_custom_call.1} parent=5 // pred_region
        // Predicated region
        $region21: #{tpu_custom_call.1} parent=19 // pred_check
          %p192 = pneg %p57
        $region22: #{tpu_custom_call.1} parent=19 // pred_check_branch
          %194 = sbr.rel (%p192) target = $region24
        $region23: #{tpu_custom_call.1} parent=19 // pred_region
          %s195 = sand.u32 %s47, 1
          %s196 = scalar_lea.sflag [#allocation5], %s195
          %s197 = sand.u32 %s47, 1
          %s198 = smul.addr %s197, 8
          %s199 = scalar_lea.vmem [#allocation4], %s198
          %s200 = sadd.s32 %s22, %s23
          %s201 = smul.u32 2, %s200
          %s203 = ssub.s32 128, 128
          %204 = vsyncadd %s196, %s203
          %s205 = smul.addr %s21, 2
          %s206 = sadd.s32 %s201, %s205
          %s207 = smul.addr %s206, 64
          %s208 = scalar_lea.hbm %s0, %s207
          %s210 = sshll.u32 %s199, 4
          %s211 = int_to_ptr.vmem [resolvable:$true] %s210
          %213 = dma.hbm_to_vmem [thread:$0]  %s208, 128, %s211, %s196
        $region24: #{tpu_custom_call.1} parent=19 // pred_fallthru
          _
        // Predicated region
        $region25: #{tpu_custom_call.1} parent=19 // pred_check
          %p214 = pneg %p87
        $region26: #{tpu_custom_call.1} parent=19 // pred_check_branch
          %216 = sbr.rel (%p214) target = $region28
        $region27: #{tpu_custom_call.1} parent=19 // pred_region
          %s217 = sadd.s32 %s22, %s23
          %s218 = smul.u32 2, %s217
          %p219 = scmp.lt.s32.totalorder %s21, 1
          %s220 = scalar_select %p219, %s21, 1
          %p221 = scmp.lt.s32.totalorder %s218, 1
          %s222 = scalar_select %p221, %s218, 1
          %s223 = smul.addr %s220, 2
          %s224 = sadd.s32 %s222, %s223
          %s225 = scalar_lea.vmem %s1, %s224
          %s226 = sadd.s32 %s22, %s23
          %s227 = smul.u32 2, %s226
        $region28: #{tpu_custom_call.1} parent=19 // pred_fallthru
          _
      $region20: #{tpu_custom_call.1} parent=5 // pred_fallthru
        _
      %p228 = scmp.le.s32.totalorder 1, %s14
      %p229 = scmp.lt.s32.totalorder %s14, 3
      %p230 = pnand %p228, %p229
      %p231 = pneg %p230
      // Predicated region
      $region29: #{tpu_custom_call.1} parent=5 // pred_check
        _
      $region30: #{tpu_custom_call.1} parent=5 // pred_check_branch
        %233 = sbr.rel (%p230) target = $region32
      $region31: #{tpu_custom_call.1} parent=5 // pred_region
        %s234 = ssub.s32 %s14, 1
        %s235 = sand.u32 %s50, 1
        %s236 = scalar_lea.sflag [#allocation5], %s235
        %s237 = sand.u32 %s50, 1
        %s238 = smul.addr %s237, 8
        %s239 = scalar_lea.vmem [#allocation4], %s238
        // Predicated region
        $region33: #{tpu_custom_call.1} parent=31 // pred_check
          %p240 = pneg %p63
        $region34: #{tpu_custom_call.1} parent=31 // pred_check_branch
          %242 = sbr.rel (%p240) target = $region36
        $region35: #{tpu_custom_call.1} parent=31 // pred_region
          %243 = dma.done %s236, 128
        $region36: #{tpu_custom_call.1} parent=31 // pred_fallthru
          _
        %s244 = sand.u32 %s50, 1
        %s245 = scalar_lea.sflag [#allocation5], %s244
        %s246 = sand.u32 %s50, 1
        %s247 = smul.addr %s246, 8
        %s248 = scalar_lea.vmem [#allocation4], %s247
        %p249 = pneg %p63
        %p250 = pneg %p60
        %s251 = sadd.s32 %s25, %s26
        %s252 = smul.u32 2, %s251
        %p253 = scmp.lt.s32.totalorder %s24, 1
        %s254 = scalar_select %p253, %s24, 1
        %p255 = scmp.lt.s32.totalorder %s252, 1
        %s256 = scalar_select %p255, %s252, 1
        %s257 = smul.addr %s254, 2
        %s258 = sadd.s32 %s256, %s257
        %s259 = scalar_lea.vmem %s1, %s258
        %p260 = pneg %p93
        %p261 = pneg %p90
        %p262 = pneg %p114
        %p263 = pneg %p111
        %p264 = pneg %p142
        %p265 = pneg %p139
        %p266 = scmp.lt.s32.totalorder %s24, 1
        %s267 = scalar_select %p266, %s24, 1
        %p268 = scmp.lt.s32.totalorder %s25, 0
        %s269 = scalar_select %p268, %s25, 0
        %s270 = sadd.s32 %s269, %s267
        %s271 = scalar_lea.vmem %s3, %s270
        %p272 = pneg %p170
        %p273 = pneg %p167
        %p274 = scmp.lt.s32.totalorder %s24, 1
        %s275 = scalar_select %p274, %s24, 1
        %p276 = scmp.lt.s32.totalorder %s25, 0
        %s277 = scalar_select %p276, %s25, 0
        %s278 = sadd.s32 %s277, %s275
        %s279 = scalar_lea.vmem %s4, %s278
        %s280 = sadd.s32 %s25, %s26
        %s281 = smul.u32 2, %s280
        %s282 = sadd.s32 %s25, %s26
        %s283 = smul.u32 2, %s282
        %p284 = scmp.lt.s32.totalorder %s24, 1
        %s285 = scalar_select %p284, %s24, 1
        %p286 = scmp.lt.s32.totalorder %s283, 1
        %s287 = scalar_select %p286, %s283, 1
        %s288 = smul.addr %s285, 2
        %s289 = sadd.s32 %s287, %s288
        %s290 = scalar_lea.vmem %s1, %s289
        %s291 = sadd.s32 %s25, %s26
        %s292 = smul.u32 2, %s291
        %p293 = scmp.lt.s32.totalorder %s24, 1
        %s294 = scalar_select %p293, %s24, 1
        %p295 = scmp.lt.s32.totalorder %s25, 0
        %s296 = scalar_select %p295, %s25, 0
        %s297 = sadd.s32 %s296, %s294
        %s298 = scalar_lea.vmem %s3, %s297
        %p299 = scmp.lt.s32.totalorder %s24, 1
        %s300 = scalar_select %p299, %s24, 1
        %p301 = scmp.lt.s32.totalorder %s25, 0
        %s302 = scalar_select %p301, %s25, 0
        %s303 = sadd.s32 %s302, %s300
        %s304 = scalar_lea.vmem %s4, %s303
        %p305 = scmp.eq.s32.totalorder %s26, 0
        // Predicated region
        $region37: #{tpu_custom_call.1} parent=31 // pred_check
          %p306 = pneg %p305
        $region38: #{tpu_custom_call.1} parent=31 // pred_check_branch
          %308 = sbr.rel (%p306) target = $region40
        $region39: #{tpu_custom_call.1} parent=31 // pred_region
          %v309 = vlaneseq
          %vm310 = vcmp.ge.s32.totalorder %v309, 0
          %vm311 = vcmp.lt.s32.totalorder %v309, 256
          %vm312 = vmand %vm310, %vm311
          %313 = vst.msk [vmem:[#allocation2] sm:$0x3] %vm312, 0.0
          %314 = vst.msk [vmem:[#allocation3] sm:$0x3] %vm312, 0.0
        $region40: #{tpu_custom_call.1} parent=31 // pred_fallthru
          _
        %v315 = vld [vmem:[%s239] sm:$0xff]
        %v316 = vld [vmem:[%s290] sm:$0x3]
        %v317 = vld [vmem:[%s2] sm:$0xf]
        %v319 = vcombine.high %v315, %v315
        %vm321 = vcmask 1043456
        %v322 = vsel %vm321, %v315, -inf
        %v323 = vrot.slane %v322, 4
        %v324 = vmax.f32 %v322, %v323
        %v325 = vrot.slane %v324, 2
        %v326 = vmax.f32 %v324, %v325
        %v327 = vrot.slane %v326, 1
        %v328 = vmax.f32 %v326, %v327
        %v329 = vsel %vm321, %v319, -inf
        %v330 = vrot.slane %v329, 4
        %v331 = vmax.f32 %v329, %v330
        %v332 = vrot.slane %v331, 2
        %v333 = vmax.f32 %v331, %v332
        %v334 = vrot.slane %v333, 1
        %v335 = vmax.f32 %v333, %v334
        %v338 = vcombine.low %v328, %v335
        %v340 = vsub.f32 %v315, %v338
        %v341 = vmul.f32 %v340, 1.442695
        %v342 = vpow.pop %v341
        %v344 = vcombine.high %v342, %v342
        %v346 = vsel %vm321, %v342, 0.0
        %v347 = vrot.slane %v346, 4
        %v348 = vadd.f32 %v346, %v347
        %v349 = vrot.slane %v348, 2
        %v350 = vadd.f32 %v348, %v349
        %v351 = vrot.slane %v350, 1
        %v352 = vadd.f32 %v350, %v351
        %v353 = vsel %vm321, %v344, 0.0
        %v354 = vrot.slane %v353, 4
        %v355 = vadd.f32 %v353, %v354
        %v356 = vrot.slane %v355, 2
        %v357 = vadd.f32 %v355, %v356
        %v358 = vrot.slane %v357, 1
        %v359 = vadd.f32 %v357, %v358
        %v360 = vlaneseq
        %v361 = vshrl.u32 %v360, 7
        %v362 = vlaneseq
        %v363 = vshrl.u32 %v362, 7
        %v364 = vsub.s32 0, %v363
        %v365 = vrot.slane %v316, %v364
        %v366 = vlaneseq
        %v367 = vshrl.u32 %v366, 7
        %v368 = vsub.s32 1, %v367
        %v369 = vrot.slane %v316, %v368
        %vm370 = vcmp.eq.s32.totalorder %v361, %v365
        %vm371 = vcmp.eq.s32.totalorder %v361, %v369
        %v372 = vsel %vm370, %v315, 0.0
        %v373 = vsel %vm371, %v319, 0.0
        %v374 = vsel %vm321, %v372, 0.0
        %v375 = vrot.slane %v374, 4
        %v376 = vadd.f32 %v374, %v375
        %v377 = vrot.slane %v376, 2
        %v378 = vadd.f32 %v376, %v377
        %v379 = vrot.slane %v378, 1
        %v380 = vadd.f32 %v378, %v379
        %v381 = vsel %vm321, %v373, 0.0
        %v382 = vrot.slane %v381, 4
        %v383 = vadd.f32 %v381, %v382
        %v384 = vrot.slane %v383, 2
        %v385 = vadd.f32 %v383, %v384
        %v386 = vrot.slane %v385, 1
        %v387 = vadd.f32 %v385, %v386
        %389 = vset.pattern.permute.xlu0 0
        %390 = vperm.xlu0 %389, %v317
        %v391 = vpop.permute.xlu0 %390
        %v393 = vsel %vm370, %v391, 0.0
        %v394 = vsel %vm371, %v391, 0.0
        %v395 = vsel %vm321, %v393, 0.0
        %v396 = vrot.slane %v395, 4
        %v397 = vadd.f32 %v395, %v396
        %v398 = vrot.slane %v397, 2
        %v399 = vadd.f32 %v397, %v398
        %v400 = vrot.slane %v399, 1
        %v401 = vadd.f32 %v399, %v400
        %v402 = vsel %vm321, %v394, 0.0
        %v403 = vrot.slane %v402, 4
        %v404 = vadd.f32 %v402, %v403
        %v405 = vrot.slane %v404, 2
        %v406 = vadd.f32 %v404, %v405
        %v407 = vrot.slane %v406, 1
        %v408 = vadd.f32 %v406, %v407
        %v409 = vsub.f32 %v380, %v328
        %v410 = vsub.f32 %v387, %v335
        %v411 = vlog2.pop %v352
        %v412 = vmul.f32 %v411, 0.6931472
        %v413 = vlog2.pop %v359
        %v414 = vmul.f32 %v413, 0.6931472
        %v415 = vsub.f32 %v409, %v412
        %v416 = vsub.f32 %v410, %v414
        %v417 = vmul.f32 %v409, 1.442695
        %v418 = vpow.pop %v417
        %v419 = vmul.f32 %v410, 1.442695
        %v420 = vpow.pop %v419
        %v421 = vrcp.pop %v352
        %v422 = vmul.f32 %v418, %v421
        %v423 = vrcp.pop %v359
        %v424 = vmul.f32 %v420, %v423
        %v425 = vsub.f32 1.0, %v422
        %v426 = vsub.f32 1.0, %v424
        %v427 = vmax.f32 %v425, 0.0
        %v428 = vmax.f32 %v426, 0.0
        %v429 = vmul.f32 %v427, %v427
        %v430 = vmul.f32 %v428, %v428
        %v431 = vmul.f32 %v429, %v415
        %v432 = vmul.f32 %v430, %v416
        %vm433 = vcmp.ne.s32.totalorder %v316, 4294967196
        %v434 = vld [vmem:[#allocation2] sm:$0x3]
        %v435 = vmul.f32 %v401, %v431
        %v436 = vmul.f32 %v408, %v432
        %v439 = vcombine.low %v435, %v436
        %v441 = vunpack.c.l.s4 1966171168
        %v442 = vunpack.c.0.s8 %v441
        %v443 = vlaneseq
        %v444 = vshrl.u32 %v443, 7
        %v445 = vsub.s32 %v442, %v444
        %v446 = vrot.slane %v439, %v445
        %v448 = vunpack.c.l.s4 1966171168
        %v449 = vunpack.c.0.s8 %v448
        %v450 = vlaneseq
        %v451 = vshrl.u32 %v450, 7
        %v452 = vsub.s32 %v449, %v451
        %v453 = vrot.slane %v446, %v452
        %v455 = vsel %vm433, %v453, 0.0
        %v456 = vadd.f32 %v434, %v455
        %v457 = vlaneseq
        %vm458 = vcmp.ge.s32.totalorder %v457, 0
        %vm459 = vcmp.lt.s32.totalorder %v457, 256
        %vm460 = vmand %vm458, %vm459
        %461 = vst.msk [vmem:[#allocation2] sm:$0x3] %vm460, %v456
        %v462 = vld [vmem:[#allocation3] sm:$0x3]
        %v465 = vcombine.low %v401, %v408
        %v467 = vunpack.c.l.s4 1966171168
        %v468 = vunpack.c.0.s8 %v467
        %v469 = vlaneseq
        %v470 = vshrl.u32 %v469, 7
        %v471 = vsub.s32 %v468, %v470
        %v472 = vrot.slane %v465, %v471
        %v474 = vunpack.c.l.s4 1966171168
        %v475 = vunpack.c.0.s8 %v474
        %v476 = vlaneseq
        %v477 = vshrl.u32 %v476, 7
        %v478 = vsub.s32 %v475, %v477
        %v479 = vrot.slane %v472, %v478
        %v481 = vsel %vm433, %v479, 0.0
        %v482 = vadd.f32 %v462, %v481
        %483 = vst.msk [vmem:[#allocation3] sm:$0x3] %vm460, %v482
        // Predicated region
        $region41: #{tpu_custom_call.1} parent=31 // pred_check
          %p484 = pneg %p305
        $region42: #{tpu_custom_call.1} parent=31 // pred_check_branch
          %486 = sbr.rel (%p484) target = $region44
        $region43: #{tpu_custom_call.1} parent=31 // pred_region
          %v487 = vld [vmem:[#allocation2] sm:$0x3]
          %v489 = vlaneseq
          %v490 = vshrl.u32 %v489, 7
          %v491 = vsub.s32 0, %v490
          %v492 = vrot.slane %v487, %v491
          %v493 = vlaneseq
          %v494 = vshrl.u32 %v493, 7
          %v495 = vsub.s32 1, %v494
          %v496 = vrot.slane %v487, %v495
          %vm499 = vcmask 1040384
          %v500 = vsel %vm499, %v492, 0.0
          %v501 = vsel %vm499, %v496, 0.0
          %v502 = vadd.f32 %v500, %v501
          %503 = vadd.xlane.f32.xlu0 %v502
          %v504 = vpop.xlane.xlu0 %503
          %v505 = vrot.slane %v504, 4
          %v506 = vadd.f32 %v504, %v505
          %v507 = vrot.slane %v506, 2
          %v508 = vadd.f32 %v506, %v507
          %v509 = vrot.slane %v508, 1
          %v510 = vadd.f32 %v508, %v509
          %s511 = vtos %v510
          %s512 = ssub.f32 0.0, %s511
          %v513 = vstv %s512
          %vm514 = vcmask 0
          %515 = vst.msk [vmem:[%s298] sm:$0x1] %vm514, %v513
          %v516 = vld [vmem:[#allocation3] sm:$0x3]
          %v518 = vlaneseq
          %v519 = vshrl.u32 %v518, 7
          %v520 = vsub.s32 0, %v519
          %v521 = vrot.slane %v516, %v520
          %v522 = vlaneseq
          %v523 = vshrl.u32 %v522, 7
          %v524 = vsub.s32 1, %v523
          %v525 = vrot.slane %v516, %v524
          %v528 = vsel %vm499, %v521, 0.0
          %v529 = vsel %vm499, %v525, 0.0
          %v530 = vadd.f32 %v528, %v529
          %531 = vadd.xlane.f32.xlu0 %v530
          %v532 = vpop.xlane.xlu0 %531
          %v533 = vrot.slane %v532, 4
          %v534 = vadd.f32 %v532, %v533
          %v535 = vrot.slane %v534, 2
          %v536 = vadd.f32 %v534, %v535
          %v537 = vrot.slane %v536, 1
          %v538 = vadd.f32 %v536, %v537
          %s539 = vtos %v538
          %v540 = vstv %s539
          %541 = vst.msk [vmem:[%s304] sm:$0x1] %vm514, %v540
        $region44: #{tpu_custom_call.1} parent=31 // pred_fallthru
          _
        %p542 = scmp.lt.s32.totalorder %s24, 1
        %s543 = scalar_select %p542, %s24, 1
        %p544 = scmp.lt.s32.totalorder %s25, 0
        %s545 = scalar_select %p544, %s25, 0
        %s546 = sadd.s32 %s545, %s543
        %s547 = scalar_lea.vmem %s3, %s546
        %p548 = scmp.lt.s32.totalorder %s24, 1
        %s549 = scalar_select %p548, %s24, 1
        %p550 = scmp.lt.s32.totalorder %s25, 0
        %s551 = scalar_select %p550, %s25, 0
        %s552 = sadd.s32 %s551, %s549
        %s553 = scalar_lea.vmem %s4, %s552
        // Predicated region
        $region45: #{tpu_custom_call.1} parent=31 // pred_check
          %p554 = pneg %p139
        $region46: #{tpu_custom_call.1} parent=31 // pred_check_branch
          %556 = sbr.rel (%p554) target = $region48
        $region47: #{tpu_custom_call.1} parent=31 // pred_region
          _
        $region48: #{tpu_custom_call.1} parent=31 // pred_fallthru
          _
        // Predicated region
        $region49: #{tpu_custom_call.1} parent=31 // pred_check
          %p557 = pneg %p167
        $region50: #{tpu_custom_call.1} parent=31 // pred_check_branch
          %559 = sbr.rel (%p557) target = $region52
        $region51: #{tpu_custom_call.1} parent=31 // pred_region
          _
        $region52: #{tpu_custom_call.1} parent=31 // pred_fallthru
          _
      $region32: #{tpu_custom_call.1} parent=5 // pred_fallthru
        _
      %p560 = scmp.le.s32.totalorder 2, %s14
      // Predicated region
      $region53: #{tpu_custom_call.1} parent=5 // pred_check
        %p561 = pneg %p560
      $region54: #{tpu_custom_call.1} parent=5 // pred_check_branch
        %563 = sbr.rel (%p561) target = $region56
      $region55: #{tpu_custom_call.1} parent=5 // pred_region
        %s564 = ssub.s32 %s14, 2
        // Predicated region
        $region57: #{tpu_custom_call.1} parent=55 // pred_check
          %p565 = pneg %p145
        $region58: #{tpu_custom_call.1} parent=55 // pred_check_branch
          %567 = sbr.rel (%p565) target = $region60
        $region59: #{tpu_custom_call.1} parent=55 // pred_region
          %p568 = scmp.lt.s32.totalorder %s27, 1
          %s569 = scalar_select %p568, %s27, 1
          %p570 = scmp.lt.s32.totalorder %s28, 0
          %s571 = scalar_select %p570, %s28, 0
          %s572 = sadd.s32 %s571, %s569
          %s573 = scalar_lea.vmem %s3, %s572
        $region60: #{tpu_custom_call.1} parent=55 // pred_fallthru
          _
        // Predicated region
        $region61: #{tpu_custom_call.1} parent=55 // pred_check
          %p574 = pneg %p173
        $region62: #{tpu_custom_call.1} parent=55 // pred_check_branch
          %576 = sbr.rel (%p574) target = $region64
        $region63: #{tpu_custom_call.1} parent=55 // pred_region
          %p577 = scmp.lt.s32.totalorder %s27, 1
          %s578 = scalar_select %p577, %s27, 1
          %p579 = scmp.lt.s32.totalorder %s28, 0
          %s580 = scalar_select %p579, %s28, 0
          %s581 = sadd.s32 %s580, %s578
          %s582 = scalar_lea.vmem %s4, %s581
        $region64: #{tpu_custom_call.1} parent=55 // pred_fallthru
          _
      $region56: #{tpu_custom_call.1} parent=5 // pred_fallthru
        _
    $region6: #{tpu_custom_call.1} parent=1 // loop_footer
      %s18 = sadd.s32 1, %s14
    $region7: #{tpu_custom_call.1} parent=1 // loop_footer_branch
      %13 = sbr.rel target = $region3
    $region8: #{tpu_custom_call.1} parent=1 // loop_exit
      _
    %583 = vsyncpa [#allocation5], 1
    %s584 = scalar_lea.sflag [#allocation5], 1
    %585 = vsyncpa %s584, 1

</llo_original>
